<compile_context>
chip_gen: v7x
topology: tpu7x:2x2x1
jax: 0.10.0
libtpu: 0.0.40
codegen_flags: <defaults>
</compile_context>

<pallas_src>
import functools

import jax
import jax.numpy as jnp
from jax import lax
from jax.experimental import pallas as pl
from jax.experimental.pallas import tpu as pltpu

LANE = 512                   # lane-dense last dim (multiple of 128)
MODE1_TILE_ROWS = 256        # 256*512*4B = 512 KiB / input tile (deeper DAG)
MODE0_TILE_ROWS = 1024       # 1024*512*4B = 2 MiB / input tile (trivial DAG)
VMEM_LIMIT_BYTES = 32 * 1024 * 1024   # safe on v5e/v6e (128 MiB) and v7x (64 MiB)


# ----------------------------------------------------------------------------
# Parameter construction (deterministic, mirrors PWLA3d.__init__)
# ----------------------------------------------------------------------------
def init_pwla3d_params(N: int = 16):
    Br = jnp.float32(10.0)
    Bl = jnp.float32(-10.0)
    Kl = jnp.float32(0.0)
    Kr = jnp.float32(1.0)
    Yidx = jax.nn.relu(jnp.linspace(Bl, Br, N + 1, dtype=jnp.float32))  # (N+1,)
    running_mean = jnp.zeros((1,), jnp.float32)
    running_std = jnp.ones((1,), jnp.float32)
    return dict(N=N, Br=Br, Bl=Bl, Kl=Kl, Kr=Kr, Yidx=Yidx,
                running_mean=running_mean, running_std=running_std)


# ----------------------------------------------------------------------------
# Layout helper: lane-dense flattening with zero padding
# ----------------------------------------------------------------------------
def _flatten_lane_dense(x, max_rows):
    """Flatten x to a (rows_pad, LANE) f32 slab; returns (slab, tm, grid, total)."""
    total = x.size                                  # static under jit
    rows = -(-total // LANE)
    tm = min(max_rows, rows)                        # rows per tile (full dim if small)
    g = -(-rows // tm)
    rows_pad = g * tm
    pad = rows_pad * LANE - total
    x2 = jnp.pad(x.reshape(-1), (0, pad)).reshape(rows_pad, LANE)
    return x2, tm, g, total


# ----------------------------------------------------------------------------
# mode == 1 kernel: piecewise-linear activation
# ----------------------------------------------------------------------------
def _tree_select(x, lo, hi, a_tab, b_tab, Bl, d):
    """Binary select tree: returns (slope, intercept) of the segment
    clamp(floor((x - Bl)/d), lo, hi-1), using static scalar thresholds."""
    if hi - lo == 1:
        return a_tab[lo], b_tab[lo]
    m = (lo + hi) // 2
    a_lo, b_lo = _tree_select(x, lo, m, a_tab, b_tab, Bl, d)
    a_hi, b_hi = _tree_select(x, m, hi, a_tab, b_tab, Bl, d)
    p = x >= (Bl + m * d)                           # Bl, d: SMEM scalars; m: Python int
    return jnp.where(p, a_hi, a_lo), jnp.where(p, b_hi, b_lo)


def _pwla_mode1_kernel(scal_ref, a_ref, b_ref, x_ref, o_ref, *, N):
    # scal_ref: SMEM (7,) = [Bl, Br, Kl, Kr, bL, bR, d]
    # a_ref / b_ref: SMEM (N,) per-segment slope / intercept
    Bl = scal_ref[0]
    Br = scal_ref[1]
    Kl = scal_ref[2]
    Kr = scal_ref[3]
    bL = scal_ref[4]
    bR = scal_ref[5]
    d = scal_ref[6]

    # Hoist all SMEM table reads (scalar path) out of the vector select tree.
    a_tab = [a_ref[k] for k in range(N)]
    b_tab = [b_ref[k] for k in range(N)]

    x = x_ref[...]
    a_sel, b_sel = _tree_select(x, 0, N, a_tab, b_tab, Bl, d)
    y_mid = a_sel * x + b_sel
    # Boundary branches in slope/intercept form, folded with nested where.
    out = jnp.where(x < Bl, Kl * x + bL,
                    jnp.where(x >= Br, Kr * x + bR, y_mid))
    o_ref[...] = out.astype(o_ref.dtype)


@functools.partial(jax.jit, static_argnames=("N",))
def pwla3d_mode1(x, Bl, Br, Kl, Kr, Yidx, *, N):
    """Phase-II (mode==1) piecewise-linear activation."""
    orig_shape = x.shape
    x2, tm, g, total = _flatten_lane_dense(x.astype(jnp.float32), MODE1_TILE_ROWS)

    # Tiny host-side table precompute: slope a_k and intercept b_k per segment.
    Yidx = Yidx.astype(jnp.float32)
    d = (Br - Bl) / N
    kk = jnp.arange(N, dtype=jnp.float32)
    slopes = (Yidx[1:] - Yidx[:-1]) / d                    # (N,)
    intercepts = Yidx[:-1] - slopes * (Bl + kk * d)        # (N,)
    bL = Yidx[0] - Kl * Bl
    bR = Yidx[N] - Kr * Br
    scal = jnp.stack([jnp.float32(Bl), jnp.float32(Br), jnp.float32(Kl),
                      jnp.float32(Kr), bL, bR, jnp.float32(d)]).astype(jnp.float32)

    out2 = pl.pallas_call(
        functools.partial(_pwla_mode1_kernel, N=N),
        out_shape=jax.ShapeDtypeStruct(x2.shape, x.dtype),
        grid=(g,),
        in_specs=[
            pl.BlockSpec(memory_space=pltpu.MemorySpace.SMEM),   # scalars
            pl.BlockSpec(memory_space=pltpu.MemorySpace.SMEM),   # slopes
            pl.BlockSpec(memory_space=pltpu.MemorySpace.SMEM),   # intercepts
            pl.BlockSpec((tm, LANE), lambda i: (i, 0)),          # x tile
        ],
        out_specs=pl.BlockSpec((tm, LANE), lambda i: (i, 0)),
        compiler_params=pltpu.CompilerParams(
            dimension_semantics=("parallel",),
            vmem_limit_bytes=VMEM_LIMIT_BYTES),
    )(scal, slopes, intercepts, x2)

    return out2.reshape(-1)[:total].reshape(orig_shape)


# ----------------------------------------------------------------------------
# mode != 1 kernel: relu + fused sum / sum-of-squares partials (single HBM pass)
# ----------------------------------------------------------------------------
def _relu_stats_kernel(x_ref, o_ref, stats_ref):
    xt = x_ref[...]
    o_ref[...] = jnp.maximum(xt, 0.0).astype(o_ref.dtype)
    # Per-tile partials: row 0 = per-lane sum(x), row 1 = per-lane sum(x*x).
    s1 = jnp.sum(xt, axis=0, keepdims=True)                # (1, LANE)
    s2 = jnp.sum(xt * xt, axis=0, keepdims=True)           # (1, LANE)
    row = lax.broadcasted_iota(jnp.int32, stats_ref.shape, 0)
    stats_ref[...] = jnp.where(row == 0, s1, jnp.where(row == 1, s2, 0.0))


@jax.jit
def pwla3d_mode0(x, running_mean, running_std, momentum=0.9):
    """Phase-I: relu(x) plus running-statistics update, fused in one pass."""
    orig_shape = x.shape
    x2, tm, g, total = _flatten_lane_dense(x.astype(jnp.float32), MODE0_TILE_ROWS)

    out2, stats = pl.pallas_call(
        _relu_stats_kernel,
        out_shape=(jax.ShapeDtypeStruct(x2.shape, jnp.float32),
                   jax.ShapeDtypeStruct((8 * g, LANE), jnp.float32)),
        grid=(g,),
        in_specs=[pl.BlockSpec((tm, LANE), lambda i: (i, 0))],
        out_specs=(pl.BlockSpec((tm, LANE), lambda i: (i, 0)),
                   pl.BlockSpec((8, LANE), lambda i: (i, 0))),
        compiler_params=pltpu.CompilerParams(
            dimension_semantics=("parallel",),
            vmem_limit_bytes=VMEM_LIMIT_BYTES),
    )(x2)

    out = out2.reshape(-1)[:total].reshape(orig_shape).astype(x.dtype)

    # Finish the (tiny) reduction on host; padded zeros contribute nothing.
    n = jnp.float32(total)
    s1 = jnp.sum(stats[0::8, :])
    s2 = jnp.sum(stats[1::8, :])
    mean = s1 / n
    var = jnp.maximum(s2 - s1 * s1 / n, 0.0) / (n - 1.0)   # unbiased (torch std default)
    std = jnp.sqrt(var)
    new_mean = momentum * running_mean + (1.0 - momentum) * mean
    new_std = momentum * running_std + (1.0 - momentum) * std
    return out, new_mean, new_std


# ----------------------------------------------------------------------------
# Pure-JAX reference (faithful to the PyTorch forward) for correctness check
# ----------------------------------------------------------------------------
def pwla3d_mode1_ref(x, Bl, Br, Kl, Kr, Yidx, N):
    d = (Br - Bl) / N
    idx_f = jnp.clip(jnp.floor((x - Bl) / d), 0.0, N - 1.0)
    idx = idx_f.astype(jnp.int32)
    Bdata = Bl + idx_f * d
    maskBl = (x < Bl).astype(x.dtype)
    maskBr = (x >= Br).astype(x.dtype)
    maskOther = 1.0 - maskBl - maskBr
    Ydata = Yidx[idx]
    Kdata = (Yidx[idx + 1] - Yidx[idx]) / d
    return (maskBl * ((x - Bl) * Kl + Yidx[0])
            + maskBr * ((x - Br) * Kr + Yidx[-1])
            + maskOther * ((x - Bdata) * Kdata + Ydata))


# ----------------------------------------------------------------------------
# Main
# ----------------------------------------------------------------------------
if __name__ == "__main__":
    params = init_pwla3d_params(N=16)

    key = jax.random.PRNGKey(0)
    B, C, H, L = 2, 4, 16, 16
    # scale so values fall on both sides of [Bl, Br] and all branches fire
    x = 6.0 * jax.random.normal(key, (B, C, H, L), dtype=jnp.float32)

    # mode == 1 (Phase II): piecewise-linear activation (Pallas hot path)
    y = pwla3d_mode1(x, params["Bl"], params["Br"], params["Kl"],
                     params["Kr"], params["Yidx"], N=params["N"])
    y = jax.block_until_ready(y)
    y_ref = pwla3d_mode1_ref(x, params["Bl"], params["Br"], params["Kl"],
                             params["Kr"], params["Yidx"], params["N"])
    assert jnp.allclose(y, y_ref, atol=1e-4, rtol=1e-5), "mode=1 mismatch vs reference"

    # mode != 1 (Phase I): relu + fused running-stat partials
    y0, new_mean, new_std = pwla3d_mode0(x, params["running_mean"],
                                         params["running_std"], momentum=0.9)
    y0 = jax.block_until_ready(y0)
    assert jnp.allclose(y0, jnp.maximum(x, 0.0), atol=1e-6), "mode=0 relu mismatch"
    ref_mean = 0.9 * params["running_mean"] + 0.1 * jnp.mean(x)
    ref_std = 0.9 * params["running_std"] + 0.1 * jnp.std(x, ddof=1)
    assert jnp.allclose(new_mean, ref_mean, atol=1e-4, rtol=1e-3), "mode=0 mean mismatch"
    assert jnp.allclose(new_std, ref_std, atol=1e-3, rtol=1e-3), "mode=0 std mismatch"

    print("KERNEL_OK")
</pallas_src>

<mosaic_0001>
module attributes {stable_mosaic.version = 11 : i64} {
  func.func @_pwla_mode1_kernel(%arg0: i32, %arg1: memref<7xf32, #tpu.memory_space<smem>>, %arg2: memref<16xf32, #tpu.memory_space<smem>>, %arg3: memref<16xf32, #tpu.memory_space<smem>>, %arg4: memref<4x512xf32, #tpu.memory_space<vmem>>, %arg5: memref<4x512xf32, #tpu.memory_space<vmem>>) attributes {dimension_semantics = [#tpu.dimension_semantics<parallel>], iteration_bounds = array<i64: 1>, scalar_prefetch = 0 : i64, scratch_operands = 0 : i64, tpu.core_type = #tpu.core_type<tc>, window_params = [{transform_indices = @transform_0, window_bounds = array<i64: 7>}, {transform_indices = @transform_1, window_bounds = array<i64: 16>}, {transform_indices = @transform_2, window_bounds = array<i64: 16>}, {transform_indices = @transform_3, window_bounds = array<i64: 4, 512>}, {transform_indices = @transform_4, window_bounds = array<i64: 4, 512>}]} {
    %c0 = arith.constant 0 : index
    %0 = memref.load %arg1[%c0] : memref<7xf32, #tpu.memory_space<smem>>
    %c1 = arith.constant 1 : index
    %1 = memref.load %arg1[%c1] : memref<7xf32, #tpu.memory_space<smem>>
    %c2 = arith.constant 2 : index
    %2 = memref.load %arg1[%c2] : memref<7xf32, #tpu.memory_space<smem>>
    %c3 = arith.constant 3 : index
    %3 = memref.load %arg1[%c3] : memref<7xf32, #tpu.memory_space<smem>>
    %c4 = arith.constant 4 : index
    %4 = memref.load %arg1[%c4] : memref<7xf32, #tpu.memory_space<smem>>
    %c5 = arith.constant 5 : index
    %5 = memref.load %arg1[%c5] : memref<7xf32, #tpu.memory_space<smem>>
    %c6 = arith.constant 6 : index
    %6 = memref.load %arg1[%c6] : memref<7xf32, #tpu.memory_space<smem>>
    %c0_0 = arith.constant 0 : index
    %7 = memref.load %arg2[%c0_0] : memref<16xf32, #tpu.memory_space<smem>>
    %c1_1 = arith.constant 1 : index
    %8 = memref.load %arg2[%c1_1] : memref<16xf32, #tpu.memory_space<smem>>
    %c2_2 = arith.constant 2 : index
    %9 = memref.load %arg2[%c2_2] : memref<16xf32, #tpu.memory_space<smem>>
    %c3_3 = arith.constant 3 : index
    %10 = memref.load %arg2[%c3_3] : memref<16xf32, #tpu.memory_space<smem>>
    %c4_4 = arith.constant 4 : index
    %11 = memref.load %arg2[%c4_4] : memref<16xf32, #tpu.memory_space<smem>>
    %c5_5 = arith.constant 5 : index
    %12 = memref.load %arg2[%c5_5] : memref<16xf32, #tpu.memory_space<smem>>
    %c6_6 = arith.constant 6 : index
    %13 = memref.load %arg2[%c6_6] : memref<16xf32, #tpu.memory_space<smem>>
    %c7 = arith.constant 7 : index
    %14 = memref.load %arg2[%c7] : memref<16xf32, #tpu.memory_space<smem>>
    %c8 = arith.constant 8 : index
    %15 = memref.load %arg2[%c8] : memref<16xf32, #tpu.memory_space<smem>>
    %c9 = arith.constant 9 : index
    %16 = memref.load %arg2[%c9] : memref<16xf32, #tpu.memory_space<smem>>
    %c10 = arith.constant 10 : index
    %17 = memref.load %arg2[%c10] : memref<16xf32, #tpu.memory_space<smem>>
    %c11 = arith.constant 11 : index
    %18 = memref.load %arg2[%c11] : memref<16xf32, #tpu.memory_space<smem>>
    %c12 = arith.constant 12 : index
    %19 = memref.load %arg2[%c12] : memref<16xf32, #tpu.memory_space<smem>>
    %c13 = arith.constant 13 : index
    %20 = memref.load %arg2[%c13] : memref<16xf32, #tpu.memory_space<smem>>
    %c14 = arith.constant 14 : index
    %21 = memref.load %arg2[%c14] : memref<16xf32, #tpu.memory_space<smem>>
    %c15 = arith.constant 15 : index
    %22 = memref.load %arg2[%c15] : memref<16xf32, #tpu.memory_space<smem>>
    %c0_7 = arith.constant 0 : index
    %23 = memref.load %arg3[%c0_7] : memref<16xf32, #tpu.memory_space<smem>>
    %c1_8 = arith.constant 1 : index
    %24 = memref.load %arg3[%c1_8] : memref<16xf32, #tpu.memory_space<smem>>
    %c2_9 = arith.constant 2 : index
    %25 = memref.load %arg3[%c2_9] : memref<16xf32, #tpu.memory_space<smem>>
    %c3_10 = arith.constant 3 : index
    %26 = memref.load %arg3[%c3_10] : memref<16xf32, #tpu.memory_space<smem>>
    %c4_11 = arith.constant 4 : index
    %27 = memref.load %arg3[%c4_11] : memref<16xf32, #tpu.memory_space<smem>>
    %c5_12 = arith.constant 5 : index
    %28 = memref.load %arg3[%c5_12] : memref<16xf32, #tpu.memory_space<smem>>
    %c6_13 = arith.constant 6 : index
    %29 = memref.load %arg3[%c6_13] : memref<16xf32, #tpu.memory_space<smem>>
    %c7_14 = arith.constant 7 : index
    %30 = memref.load %arg3[%c7_14] : memref<16xf32, #tpu.memory_space<smem>>
    %c8_15 = arith.constant 8 : index
    %31 = memref.load %arg3[%c8_15] : memref<16xf32, #tpu.memory_space<smem>>
    %c9_16 = arith.constant 9 : index
    %32 = memref.load %arg3[%c9_16] : memref<16xf32, #tpu.memory_space<smem>>
    %c10_17 = arith.constant 10 : index
    %33 = memref.load %arg3[%c10_17] : memref<16xf32, #tpu.memory_space<smem>>
    %c11_18 = arith.constant 11 : index
    %34 = memref.load %arg3[%c11_18] : memref<16xf32, #tpu.memory_space<smem>>
    %c12_19 = arith.constant 12 : index
    %35 = memref.load %arg3[%c12_19] : memref<16xf32, #tpu.memory_space<smem>>
    %c13_20 = arith.constant 13 : index
    %36 = memref.load %arg3[%c13_20] : memref<16xf32, #tpu.memory_space<smem>>
    %c14_21 = arith.constant 14 : index
    %37 = memref.load %arg3[%c14_21] : memref<16xf32, #tpu.memory_space<smem>>
    %c15_22 = arith.constant 15 : index
    %38 = memref.load %arg3[%c15_22] : memref<16xf32, #tpu.memory_space<smem>>
    %c0_23 = arith.constant 0 : index
    %c0_24 = arith.constant 0 : index
    %39 = vector.load %arg4[%c0_23, %c0_24] : memref<4x512xf32, #tpu.memory_space<vmem>>, vector<4x512xf32>
    %cst = arith.constant 1.000000e+00 : f32
    %40 = arith.mulf %cst, %6 : f32
    %41 = arith.addf %0, %40 : f32
    %42 = vector.broadcast %41 : f32 to vector<4x512xf32>
    %43 = arith.cmpf oge, %39, %42 : vector<4x512xf32>
    %44 = vector.broadcast %8 : f32 to vector<4x512xf32>
    %45 = vector.broadcast %7 : f32 to vector<4x512xf32>
    %46 = arith.select %43, %44, %45 : vector<4x512xi1>, vector<4x512xf32>
    %47 = vector.broadcast %24 : f32 to vector<4x512xf32>
    %48 = vector.broadcast %23 : f32 to vector<4x512xf32>
    %49 = arith.select %43, %47, %48 : vector<4x512xi1>, vector<4x512xf32>
    %cst_25 = arith.constant 3.000000e+00 : f32
    %50 = arith.mulf %cst_25, %6 : f32
    %51 = arith.addf %0, %50 : f32
    %52 = vector.broadcast %51 : f32 to vector<4x512xf32>
    %53 = arith.cmpf oge, %39, %52 : vector<4x512xf32>
    %54 = vector.broadcast %10 : f32 to vector<4x512xf32>
    %55 = vector.broadcast %9 : f32 to vector<4x512xf32>
    %56 = arith.select %53, %54, %55 : vector<4x512xi1>, vector<4x512xf32>
    %57 = vector.broadcast %26 : f32 to vector<4x512xf32>
    %58 = vector.broadcast %25 : f32 to vector<4x512xf32>
    %59 = arith.select %53, %57, %58 : vector<4x512xi1>, vector<4x512xf32>
    %cst_26 = arith.constant 2.000000e+00 : f32
    %60 = arith.mulf %cst_26, %6 : f32
    %61 = arith.addf %0, %60 : f32
    %62 = vector.broadcast %61 : f32 to vector<4x512xf32>
    %63 = arith.cmpf oge, %39, %62 : vector<4x512xf32>
    %64 = arith.select %63, %56, %46 : vector<4x512xi1>, vector<4x512xf32>
    %65 = arith.select %63, %59, %49 : vector<4x512xi1>, vector<4x512xf32>
    %cst_27 = arith.constant 5.000000e+00 : f32
    %66 = arith.mulf %cst_27, %6 : f32
    %67 = arith.addf %0, %66 : f32
    %68 = vector.broadcast %67 : f32 to vector<4x512xf32>
    %69 = arith.cmpf oge, %39, %68 : vector<4x512xf32>
    %70 = vector.broadcast %12 : f32 to vector<4x512xf32>
    %71 = vector.broadcast %11 : f32 to vector<4x512xf32>
    %72 = arith.select %69, %70, %71 : vector<4x512xi1>, vector<4x512xf32>
    %73 = vector.broadcast %28 : f32 to vector<4x512xf32>
    %74 = vector.broadcast %27 : f32 to vector<4x512xf32>
    %75 = arith.select %69, %73, %74 : vector<4x512xi1>, vector<4x512xf32>
    %cst_28 = arith.constant 7.000000e+00 : f32
    %76 = arith.mulf %cst_28, %6 : f32
    %77 = arith.addf %0, %76 : f32
    %78 = vector.broadcast %77 : f32 to vector<4x512xf32>
    %79 = arith.cmpf oge, %39, %78 : vector<4x512xf32>
    %80 = vector.broadcast %14 : f32 to vector<4x512xf32>
    %81 = vector.broadcast %13 : f32 to vector<4x512xf32>
    %82 = arith.select %79, %80, %81 : vector<4x512xi1>, vector<4x512xf32>
    %83 = vector.broadcast %30 : f32 to vector<4x512xf32>
    %84 = vector.broadcast %29 : f32 to vector<4x512xf32>
    %85 = arith.select %79, %83, %84 : vector<4x512xi1>, vector<4x512xf32>
    %cst_29 = arith.constant 6.000000e+00 : f32
    %86 = arith.mulf %cst_29, %6 : f32
    %87 = arith.addf %0, %86 : f32
    %88 = vector.broadcast %87 : f32 to vector<4x512xf32>
    %89 = arith.cmpf oge, %39, %88 : vector<4x512xf32>
    %90 = arith.select %89, %82, %72 : vector<4x512xi1>, vector<4x512xf32>
    %91 = arith.select %89, %85, %75 : vector<4x512xi1>, vector<4x512xf32>
    %cst_30 = arith.constant 4.000000e+00 : f32
    %92 = arith.mulf %cst_30, %6 : f32
    %93 = arith.addf %0, %92 : f32
    %94 = vector.broadcast %93 : f32 to vector<4x512xf32>
    %95 = arith.cmpf oge, %39, %94 : vector<4x512xf32>
    %96 = arith.select %95, %90, %64 : vector<4x512xi1>, vector<4x512xf32>
    %97 = arith.select %95, %91, %65 : vector<4x512xi1>, vector<4x512xf32>
    %cst_31 = arith.constant 9.000000e+00 : f32
    %98 = arith.mulf %cst_31, %6 : f32
    %99 = arith.addf %0, %98 : f32
    %100 = vector.broadcast %99 : f32 to vector<4x512xf32>
    %101 = arith.cmpf oge, %39, %100 : vector<4x512xf32>
    %102 = vector.broadcast %16 : f32 to vector<4x512xf32>
    %103 = vector.broadcast %15 : f32 to vector<4x512xf32>
    %104 = arith.select %101, %102, %103 : vector<4x512xi1>, vector<4x512xf32>
    %105 = vector.broadcast %32 : f32 to vector<4x512xf32>
    %106 = vector.broadcast %31 : f32 to vector<4x512xf32>
    %107 = arith.select %101, %105, %106 : vector<4x512xi1>, vector<4x512xf32>
    %cst_32 = arith.constant 1.100000e+01 : f32
    %108 = arith.mulf %cst_32, %6 : f32
    %109 = arith.addf %0, %108 : f32
    %110 = vector.broadcast %109 : f32 to vector<4x512xf32>
    %111 = arith.cmpf oge, %39, %110 : vector<4x512xf32>
    %112 = vector.broadcast %18 : f32 to vector<4x512xf32>
    %113 = vector.broadcast %17 : f32 to vector<4x512xf32>
    %114 = arith.select %111, %112, %113 : vector<4x512xi1>, vector<4x512xf32>
    %115 = vector.broadcast %34 : f32 to vector<4x512xf32>
    %116 = vector.broadcast %33 : f32 to vector<4x512xf32>
    %117 = arith.select %111, %115, %116 : vector<4x512xi1>, vector<4x512xf32>
    %cst_33 = arith.constant 1.000000e+01 : f32
    %118 = arith.mulf %cst_33, %6 : f32
    %119 = arith.addf %0, %118 : f32
    %120 = vector.broadcast %119 : f32 to vector<4x512xf32>
    %121 = arith.cmpf oge, %39, %120 : vector<4x512xf32>
    %122 = arith.select %121, %114, %104 : vector<4x512xi1>, vector<4x512xf32>
    %123 = arith.select %121, %117, %107 : vector<4x512xi1>, vector<4x512xf32>
    %cst_34 = arith.constant 1.300000e+01 : f32
    %124 = arith.mulf %cst_34, %6 : f32
    %125 = arith.addf %0, %124 : f32
    %126 = vector.broadcast %125 : f32 to vector<4x512xf32>
    %127 = arith.cmpf oge, %39, %126 : vector<4x512xf32>
    %128 = vector.broadcast %20 : f32 to vector<4x512xf32>
    %129 = vector.broadcast %19 : f32 to vector<4x512xf32>
    %130 = arith.select %127, %128, %129 : vector<4x512xi1>, vector<4x512xf32>
    %131 = vector.broadcast %36 : f32 to vector<4x512xf32>
    %132 = vector.broadcast %35 : f32 to vector<4x512xf32>
    %133 = arith.select %127, %131, %132 : vector<4x512xi1>, vector<4x512xf32>
    %cst_35 = arith.constant 1.500000e+01 : f32
    %134 = arith.mulf %cst_35, %6 : f32
    %135 = arith.addf %0, %134 : f32
    %136 = vector.broadcast %135 : f32 to vector<4x512xf32>
    %137 = arith.cmpf oge, %39, %136 : vector<4x512xf32>
    %138 = vector.broadcast %22 : f32 to vector<4x512xf32>
    %139 = vector.broadcast %21 : f32 to vector<4x512xf32>
    %140 = arith.select %137, %138, %139 : vector<4x512xi1>, vector<4x512xf32>
    %141 = vector.broadcast %38 : f32 to vector<4x512xf32>
    %142 = vector.broadcast %37 : f32 to vector<4x512xf32>
    %143 = arith.select %137, %141, %142 : vector<4x512xi1>, vector<4x512xf32>
    %cst_36 = arith.constant 1.400000e+01 : f32
    %144 = arith.mulf %cst_36, %6 : f32
    %145 = arith.addf %0, %144 : f32
    %146 = vector.broadcast %145 : f32 to vector<4x512xf32>
    %147 = arith.cmpf oge, %39, %146 : vector<4x512xf32>
    %148 = arith.select %147, %140, %130 : vector<4x512xi1>, vector<4x512xf32>
    %149 = arith.select %147, %143, %133 : vector<4x512xi1>, vector<4x512xf32>
    %cst_37 = arith.constant 1.200000e+01 : f32
    %150 = arith.mulf %cst_37, %6 : f32
    %151 = arith.addf %0, %150 : f32
    %152 = vector.broadcast %151 : f32 to vector<4x512xf32>
    %153 = arith.cmpf oge, %39, %152 : vector<4x512xf32>
    %154 = arith.select %153, %148, %122 : vector<4x512xi1>, vector<4x512xf32>
    %155 = arith.select %153, %149, %123 : vector<4x512xi1>, vector<4x512xf32>
    %cst_38 = arith.constant 8.000000e+00 : f32
    %156 = arith.mulf %cst_38, %6 : f32
    %157 = arith.addf %0, %156 : f32
    %158 = vector.broadcast %157 : f32 to vector<4x512xf32>
    %159 = arith.cmpf oge, %39, %158 : vector<4x512xf32>
    %160 = arith.select %159, %154, %96 : vector<4x512xi1>, vector<4x512xf32>
    %161 = arith.select %159, %155, %97 : vector<4x512xi1>, vector<4x512xf32>
    %162 = arith.mulf %160, %39 : vector<4x512xf32>
    %163 = arith.addf %162, %161 : vector<4x512xf32>
    %164 = vector.broadcast %0 : f32 to vector<4x512xf32>
    %165 = arith.cmpf olt, %39, %164 : vector<4x512xf32>
    %166 = vector.broadcast %2 : f32 to vector<4x512xf32>
    %167 = arith.mulf %166, %39 : vector<4x512xf32>
    %168 = vector.broadcast %4 : f32 to vector<4x512xf32>
    %169 = arith.addf %167, %168 : vector<4x512xf32>
    %170 = vector.broadcast %1 : f32 to vector<4x512xf32>
    %171 = arith.cmpf oge, %39, %170 : vector<4x512xf32>
    %172 = vector.broadcast %3 : f32 to vector<4x512xf32>
    %173 = arith.mulf %172, %39 : vector<4x512xf32>
    %174 = vector.broadcast %5 : f32 to vector<4x512xf32>
    %175 = arith.addf %173, %174 : vector<4x512xf32>
    %176 = arith.select %171, %175, %163 : vector<4x512xi1>, vector<4x512xf32>
    %177 = arith.select %165, %169, %176 : vector<4x512xi1>, vector<4x512xf32>
    %c0_39 = arith.constant 0 : index
    %c0_40 = arith.constant 0 : index
    %178 = vector.load %arg5[%c0_39, %c0_40] : memref<4x512xf32, #tpu.memory_space<vmem>>, vector<4x512xf32>
    tpu.vector_store %arg5[%c0_39, %c0_40], %177 {strides = array<i32>} : memref<4x512xf32, #tpu.memory_space<vmem>>, vector<4x512xf32>,
    return
  }
  func.func @transform_0(%arg0: i32) -> i32 {
    %c0_i32 = arith.constant 0 : i32
    %c0_i32_0 = arith.constant 0 : i32
    return %c0_i32 : i32
  }
  func.func @transform_1(%arg0: i32) -> i32 {
    %c0_i32 = arith.constant 0 : i32
    %c0_i32_0 = arith.constant 0 : i32
    return %c0_i32 : i32
  }
  func.func @transform_2(%arg0: i32) -> i32 {
    %c0_i32 = arith.constant 0 : i32
    %c0_i32_0 = arith.constant 0 : i32
    return %c0_i32 : i32
  }
  func.func @transform_3(%arg0: i32) -> (i32, i32) {
    %c0_i32 = arith.constant 0 : i32
    %c0_i32_0 = arith.constant 0 : i32
    return %arg0, %c0_i32 : i32, i32
  }
  func.func @transform_4(%arg0: i32) -> (i32, i32) {
    %c0_i32 = arith.constant 0 : i32
    %c0_i32_0 = arith.constant 0 : i32
    return %arg0, %c0_i32 : i32, i32
  }
}

</mosaic_0001>

<llo_original>
// kernel: pwla3d_mode1.1
$region0: #{pwla3d_mode1.1}
  #allocation0 [shape = 'u32[]', space=smem, size = 0x4, offset = 0x4, fixed_abs, tag = 'smem constant byte address 0x4 - core index']
  #allocation1 [shape = 'u32[144,128]{1,0:T(1,128)}', space=vmem, size = 0x12000, scoped, tag = 'internal scratch']
  %s0 = inlined_call_operand.vmem [shape: f32[7], index: 0, kind: input, shape index: {}]
  %s1 = inlined_call_operand.vmem [shape: f32[16], index: 1, kind: input, shape index: {}]
  %s2 = inlined_call_operand.vmem [shape: f32[16], index: 2, kind: input, shape index: {}]
  %s3 = inlined_call_operand.vmem [shape: f32[4,512], index: 3, kind: input, shape index: {}]
  %s4 = inlined_call_operand.vmem [shape: f32[4,512], index: 4, kind: output, shape index: {}]
  %s5 = sld [smem:[#allocation0]]
  $region38: #{pwla3d_mode1.1} parent=0
    _
  %s7 = ssub.s32 1, %s5
  %s8 = scalar_select 0, %s7, %s5
  $region1: #{pwla3d_mode1.1} parent=0
    #allocation2 [shape = 'u8[512]{0}', space=smem, size = 0x200, scoped, tag = 'input window, operand 0, single buffered']
    #allocation3 [shape = 's32[1]{0}', space=sflag, size = 0x4, scoped, tag = 'scoped memory for pwla3d_mode1.1']
    #allocation4 [shape = 'u8[512]{0}', space=smem, size = 0x200, scoped, tag = 'input window, operand 1, single buffered']
    #allocation5 [shape = 's32[1]{0}', space=sflag, size = 0x4, scoped, tag = 'scoped memory for pwla3d_mode1.1']
    #allocation6 [shape = 'u8[512]{0}', space=smem, size = 0x200, scoped, tag = 'input window, operand 2, single buffered']
    %9 = vsyncpa [#allocation3], 0
    %10 = vsyncpa [#allocation5], 0
    // Predicated region
    $region2: #{pwla3d_mode1.1} parent=1 // pred_check
      _
    $region3: #{pwla3d_mode1.1} parent=1 // pred_check_branch
      %12 = sbr.rel (0) target = $region5
    $region4: #{pwla3d_mode1.1} parent=1 // pred_region
      %s14 = ssub.s32 16, 16
      %15 = vsyncadd [#allocation3], %s14
      %s17 = sshll.u32 %s0, 4
      %s18 = int_to_ptr.vmem [resolvable:$true] %s17
      %20 = dma.vmem_to_smem %s18, 16, [#allocation2], [#allocation3]
    $region5: #{pwla3d_mode1.1} parent=1 // pred_fallthru
      _
    // Predicated region
    $region6: #{pwla3d_mode1.1} parent=1 // pred_check
      _
    $region7: #{pwla3d_mode1.1} parent=1 // pred_check_branch
      %22 = sbr.rel (0) target = $region9
    $region8: #{pwla3d_mode1.1} parent=1 // pred_region
      %s24 = ssub.s32 16, 16
      %25 = vsyncadd [#allocation5], %s24
      %s27 = sshll.u32 %s1, 4
      %s28 = int_to_ptr.vmem [resolvable:$true] %s27
      %30 = dma.vmem_to_smem %s28, 16, [#allocation4], [#allocation5]
    $region9: #{pwla3d_mode1.1} parent=1 // pred_fallthru
      _
    // Predicated region
    $region10: #{pwla3d_mode1.1} parent=1 // pred_check
      _
    $region11: #{pwla3d_mode1.1} parent=1 // pred_check_branch
      %32 = sbr.rel (0) target = $region13
    $region12: #{pwla3d_mode1.1} parent=1 // pred_region
      %s34 = ssub.s32 16, 16
      %35 = vsyncadd [#allocation5], %s34
      %s37 = sshll.u32 %s2, 4
      %s38 = int_to_ptr.vmem [resolvable:$true] %s37
      %40 = dma.vmem_to_smem %s38, 16, [#allocation6], [#allocation5]
    $region13: #{pwla3d_mode1.1} parent=1 // pred_fallthru
      _
    // Predicated region
    $region14: #{pwla3d_mode1.1} parent=1 // pred_check
      _
    $region15: #{pwla3d_mode1.1} parent=1 // pred_check_branch
      %42 = sbr.rel (0) target = $region17
    $region16: #{pwla3d_mode1.1} parent=1 // pred_region
      _
    $region17: #{pwla3d_mode1.1} parent=1 // pred_fallthru
      _
    // Predicated region
    $region18: #{pwla3d_mode1.1} parent=1 // pred_check
      _
    $region19: #{pwla3d_mode1.1} parent=1 // pred_check_branch
      %44 = sbr.rel (0) target = $region21
    $region20: #{pwla3d_mode1.1} parent=1 // pred_region
      %45 = dma.done [#allocation3], 16
    $region21: #{pwla3d_mode1.1} parent=1 // pred_fallthru
      _
    // Predicated region
    $region22: #{pwla3d_mode1.1} parent=1 // pred_check
      _
    $region23: #{pwla3d_mode1.1} parent=1 // pred_check_branch
      %47 = sbr.rel (0) target = $region25
    $region24: #{pwla3d_mode1.1} parent=1 // pred_region
      %48 = dma.done [#allocation5], 16
    $region25: #{pwla3d_mode1.1} parent=1 // pred_fallthru
      _
    // Predicated region
    $region26: #{pwla3d_mode1.1} parent=1 // pred_check
      _
    $region27: #{pwla3d_mode1.1} parent=1 // pred_check_branch
      %50 = sbr.rel (0) target = $region29
    $region28: #{pwla3d_mode1.1} parent=1 // pred_region
      %51 = dma.done [#allocation5], 16
    $region29: #{pwla3d_mode1.1} parent=1 // pred_fallthru
      _
    %52 = sfence
    %s53 = sld [smem:[#allocation2]]
    %s54 = sld [smem:[#allocation2 + $0x1]]
    %s55 = sld [smem:[#allocation2 + $0x2]]
    %s56 = sld [smem:[#allocation2 + $0x3]]
    %s57 = sld [smem:[#allocation2 + $0x4]]
    %s58 = sld [smem:[#allocation2 + $0x5]]
    %s59 = sld [smem:[#allocation2 + $0x6]]
    %s60 = sld [smem:[#allocation4]]
    %s61 = sld [smem:[#allocation4 + $0x1]]
    %s62 = sld [smem:[#allocation4 + $0x2]]
    %s63 = sld [smem:[#allocation4 + $0x3]]
    %s64 = sld [smem:[#allocation4 + $0x4]]
    %s65 = sld [smem:[#allocation4 + $0x5]]
    %s66 = sld [smem:[#allocation4 + $0x6]]
    %s67 = sld [smem:[#allocation4 + $0x7]]
    %s68 = sld [smem:[#allocation4 + $0x8]]
    %s69 = sld [smem:[#allocation4 + $0x9]]
    %s70 = sld [smem:[#allocation4 + $0xa]]
    %s71 = sld [smem:[#allocation4 + $0xb]]
    %s72 = sld [smem:[#allocation4 + $0xc]]
    %s73 = sld [smem:[#allocation4 + $0xd]]
    %s74 = sld [smem:[#allocation4 + $0xe]]
    %s75 = sld [smem:[#allocation4 + $0xf]]
    %s76 = sld [smem:[#allocation6]]
    %s77 = sld [smem:[#allocation6 + $0x1]]
    %s78 = sld [smem:[#allocation6 + $0x2]]
    %s79 = sld [smem:[#allocation6 + $0x3]]
    %s80 = sld [smem:[#allocation6 + $0x4]]
    %s81 = sld [smem:[#allocation6 + $0x5]]
    %s82 = sld [smem:[#allocation6 + $0x6]]
    %s83 = sld [smem:[#allocation6 + $0x7]]
    %s84 = sld [smem:[#allocation6 + $0x8]]
    %s85 = sld [smem:[#allocation6 + $0x9]]
    %s86 = sld [smem:[#allocation6 + $0xa]]
    %s87 = sld [smem:[#allocation6 + $0xb]]
    %s88 = sld [smem:[#allocation6 + $0xc]]
    %s89 = sld [smem:[#allocation6 + $0xd]]
    %s90 = sld [smem:[#allocation6 + $0xe]]
    %s91 = sld [smem:[#allocation6 + $0xf]]
    %v92 = vld [vmem:[%s3] sm:$0xff]
    %v93 = vld [vmem:[%s3 + $0x8] sm:$0xff]
    %s94 = sadd.f32 %s53, %s59
    %v95 = vstv %s94
    %vm96 = vcmp.ge.f32.partialorder %v92, %v95
    %vm97 = vcmp.ge.f32.partialorder %v93, %v95
    %v98 = vstv %s61
    %v99 = vstv %s60
    %v100 = vsel %vm96, %v98, %v99
    %v101 = vsel %vm97, %v98, %v99
    %v102 = vstv %s77
    %v103 = vstv %s76
    %v104 = vsel %vm96, %v102, %v103
    %v105 = vsel %vm97, %v102, %v103
    %s106 = smul.f32 %s59, 3.0
    %s107 = sadd.f32 %s53, %s106
    %v108 = vstv %s107
    %vm109 = vcmp.ge.f32.partialorder %v92, %v108
    %vm110 = vcmp.ge.f32.partialorder %v93, %v108
    %v111 = vstv %s63
    %v112 = vstv %s62
    %v113 = vsel %vm109, %v111, %v112
    %v114 = vsel %vm110, %v111, %v112
    %v115 = vstv %s79
    %v116 = vstv %s78
    %v117 = vsel %vm109, %v115, %v116
    %v118 = vsel %vm110, %v115, %v116
    %s119 = smul.f32 %s59, 2.0
    %s120 = sadd.f32 %s53, %s119
    %v121 = vstv %s120
    %vm122 = vcmp.ge.f32.partialorder %v92, %v121
    %vm123 = vcmp.ge.f32.partialorder %v93, %v121
    %v124 = vsel %vm122, %v113, %v100
    %v125 = vsel %vm123, %v114, %v101
    %v126 = vsel %vm122, %v117, %v104
    %v127 = vsel %vm123, %v118, %v105
    %s128 = smul.f32 %s59, 5.0
    %s129 = sadd.f32 %s53, %s128
    %v130 = vstv %s129
    %vm131 = vcmp.ge.f32.partialorder %v92, %v130
    %vm132 = vcmp.ge.f32.partialorder %v93, %v130
    %v133 = vstv %s65
    %v134 = vstv %s64
    %v135 = vsel %vm131, %v133, %v134
    %v136 = vsel %vm132, %v133, %v134
    %v137 = vstv %s81
    %v138 = vstv %s80
    %v139 = vsel %vm131, %v137, %v138
    %v140 = vsel %vm132, %v137, %v138
    %s141 = smul.f32 %s59, 7.0
    %s142 = sadd.f32 %s53, %s141
    %v143 = vstv %s142
    %vm144 = vcmp.ge.f32.partialorder %v92, %v143
    %vm145 = vcmp.ge.f32.partialorder %v93, %v143
    %v146 = vstv %s67
    %v147 = vstv %s66
    %v148 = vsel %vm144, %v146, %v147
    %v149 = vsel %vm145, %v146, %v147
    %v150 = vstv %s83
    %v151 = vstv %s82
    %v152 = vsel %vm144, %v150, %v151
    %v153 = vsel %vm145, %v150, %v151
    %s154 = smul.f32 %s59, 6.0
    %s155 = sadd.f32 %s53, %s154
    %v156 = vstv %s155
    %vm157 = vcmp.ge.f32.partialorder %v92, %v156
    %vm158 = vcmp.ge.f32.partialorder %v93, %v156
    %v159 = vsel %vm157, %v148, %v135
    %v160 = vsel %vm158, %v149, %v136
    %v161 = vsel %vm157, %v152, %v139
    %v162 = vsel %vm158, %v153, %v140
    %s163 = smul.f32 %s59, 4.0
    %s164 = sadd.f32 %s53, %s163
    %v165 = vstv %s164
    %vm166 = vcmp.ge.f32.partialorder %v92, %v165
    %vm167 = vcmp.ge.f32.partialorder %v93, %v165
    %v168 = vsel %vm166, %v159, %v124
    %v169 = vsel %vm167, %v160, %v125
    %v170 = vsel %vm166, %v161, %v126
    %v171 = vsel %vm167, %v162, %v127
    %s172 = smul.f32 %s59, 9.0
    %s173 = sadd.f32 %s53, %s172
    %v174 = vstv %s173
    %vm175 = vcmp.ge.f32.partialorder %v92, %v174
    %vm176 = vcmp.ge.f32.partialorder %v93, %v174
    %v177 = vstv %s69
    %v178 = vstv %s68
    %v179 = vsel %vm175, %v177, %v178
    %v180 = vsel %vm176, %v177, %v178
    %v181 = vstv %s85
    %v182 = vstv %s84
    %v183 = vsel %vm175, %v181, %v182
    %v184 = vsel %vm176, %v181, %v182
    %s185 = smul.f32 %s59, 11.0
    %s186 = sadd.f32 %s53, %s185
    %v187 = vstv %s186
    %vm188 = vcmp.ge.f32.partialorder %v92, %v187
    %vm189 = vcmp.ge.f32.partialorder %v93, %v187
    %v190 = vstv %s71
    %v191 = vstv %s70
    %v192 = vsel %vm188, %v190, %v191
    %v193 = vsel %vm189, %v190, %v191
    %v194 = vstv %s87
    %v195 = vstv %s86
    %v196 = vsel %vm188, %v194, %v195
    %v197 = vsel %vm189, %v194, %v195
    %s198 = smul.f32 %s59, 10.0
    %s199 = sadd.f32 %s53, %s198
    %v200 = vstv %s199
    %vm201 = vcmp.ge.f32.partialorder %v92, %v200
    %vm202 = vcmp.ge.f32.partialorder %v93, %v200
    %v203 = vsel %vm201, %v192, %v179
    %v204 = vsel %vm202, %v193, %v180
    %v205 = vsel %vm201, %v196, %v183
    %v206 = vsel %vm202, %v197, %v184
    %s207 = smul.f32 %s59, 13.0
    %s208 = sadd.f32 %s53, %s207
    %v209 = vstv %s208
    %vm210 = vcmp.ge.f32.partialorder %v92, %v209
    %vm211 = vcmp.ge.f32.partialorder %v93, %v209
    %v212 = vstv %s73
    %v213 = vstv %s72
    %v214 = vsel %vm210, %v212, %v213
    %v215 = vsel %vm211, %v212, %v213
    %v216 = vstv %s89
    %v217 = vstv %s88
    %v218 = vsel %vm210, %v216, %v217
    %v219 = vsel %vm211, %v216, %v217
    %s220 = smul.f32 %s59, 15.0
    %s221 = sadd.f32 %s53, %s220
    %v222 = vstv %s221
    %vm223 = vcmp.ge.f32.partialorder %v92, %v222
    %vm224 = vcmp.ge.f32.partialorder %v93, %v222
    %v225 = vstv %s75
    %v226 = vstv %s74
    %v227 = vsel %vm223, %v225, %v226
    %v228 = vsel %vm224, %v225, %v226
    %v229 = vstv %s91
    %v230 = vstv %s90
    %v231 = vsel %vm223, %v229, %v230
    %v232 = vsel %vm224, %v229, %v230
    %s233 = smul.f32 %s59, 14.0
    %s234 = sadd.f32 %s53, %s233
    %v235 = vstv %s234
    %vm236 = vcmp.ge.f32.partialorder %v92, %v235
    %vm237 = vcmp.ge.f32.partialorder %v93, %v235
    %v238 = vsel %vm236, %v227, %v214
    %v239 = vsel %vm237, %v228, %v215
    %v240 = vsel %vm236, %v231, %v218
    %v241 = vsel %vm237, %v232, %v219
    %s242 = smul.f32 %s59, 12.0
    %s243 = sadd.f32 %s53, %s242
    %v244 = vstv %s243
    %vm245 = vcmp.ge.f32.partialorder %v92, %v244
    %vm246 = vcmp.ge.f32.partialorder %v93, %v244
    %v247 = vsel %vm245, %v238, %v203
    %v248 = vsel %vm246, %v239, %v204
    %v249 = vsel %vm245, %v240, %v205
    %v250 = vsel %vm246, %v241, %v206
    %s251 = smul.f32 %s59, 8.0
    %s252 = sadd.f32 %s53, %s251
    %v253 = vstv %s252
    %vm254 = vcmp.ge.f32.partialorder %v92, %v253
    %vm255 = vcmp.ge.f32.partialorder %v93, %v253
    %v256 = vsel %vm254, %v247, %v168
    %v257 = vsel %vm255, %v248, %v169
    %v258 = vsel %vm254, %v249, %v170
    %v259 = vsel %vm255, %v250, %v171
    %v260 = vmul.f32 %v256, %v92
    %v261 = vmul.f32 %v257, %v93
    %v262 = vadd.f32 %v260, %v258
    %v263 = vadd.f32 %v261, %v259
    %v264 = vstv %s53
    %vm265 = vcmp.lt.f32.partialorder %v92, %v264
    %vm266 = vcmp.lt.f32.partialorder %v93, %v264
    %v267 = vstv %s55
    %v268 = vmul.f32 %v267, %v92
    %v269 = vmul.f32 %v267, %v93
    %v270 = vstv %s57
    %v271 = vadd.f32 %v268, %v270
    %v272 = vadd.f32 %v269, %v270
    %v273 = vstv %s54
    %vm274 = vcmp.ge.f32.partialorder %v92, %v273
    %vm275 = vcmp.ge.f32.partialorder %v93, %v273
    %v276 = vstv %s56
    %v277 = vmul.f32 %v276, %v92
    %v278 = vmul.f32 %v276, %v93
    %v279 = vstv %s58
    %v280 = vadd.f32 %v277, %v279
    %v281 = vadd.f32 %v278, %v279
    %v282 = vsel %vm274, %v280, %v262
    %v283 = vsel %vm275, %v281, %v263
    %v284 = vsel %vm265, %v271, %v282
    %v285 = vsel %vm266, %v272, %v283
    %286 = vst [vmem:[%s4] sm:$0xff] %v284
    %287 = vst [vmem:[%s4 + $0x8] sm:$0xff] %v285
    // Predicated region
    $region30: #{pwla3d_mode1.1} parent=1 // pred_check
      _
    $region31: #{pwla3d_mode1.1} parent=1 // pred_check_branch
      %289 = sbr.rel (0) target = $region33
    $region32: #{pwla3d_mode1.1} parent=1 // pred_region
      _
    $region33: #{pwla3d_mode1.1} parent=1 // pred_fallthru
      _
    // Predicated region
    $region34: #{pwla3d_mode1.1} parent=1 // pred_check
      _
    $region35: #{pwla3d_mode1.1} parent=1 // pred_check_branch
      %291 = sbr.rel (0) target = $region37
    $region36: #{pwla3d_mode1.1} parent=1 // pred_region
      _
    $region37: #{pwla3d_mode1.1} parent=1 // pred_fallthru
      _
    %292 = vsyncpa [#allocation3], 1
    %293 = vsyncpa [#allocation5], 1

</llo_original>
